<compile_context>
chip_gen: v5e
topology: v5e:2x2
jax: 0.10.0
libtpu: 0.0.40
codegen_flags: <defaults>
</compile_context>

<pallas_src>
from typing import Dict, Optional, Sequence

import jax
import jax.numpy as jnp
from jax.experimental import pallas as pl
from jax.experimental.pallas import tpu as pltpu


def _round_up(x: int, m: int) -> int:
    return (x + m - 1) // m * m


# ----------------------------------------------------------------------------
# Pallas kernel: fused transposed GEMM + bias + ReLU (the "engine" compute)
# ----------------------------------------------------------------------------
def _conv_kernel(p_ref, w_ref, b_ref, o_ref):
    # p_ref: (1, Kp, TL)  transposed im2col slab (one image / lane tile)
    # w_ref: (Cout, Kp)   transposed weight (resident across the grid)
    # b_ref: (Cout, 1)    bias column        (resident across the grid)
    # o_ref: (1, Cout, TL) lane-dense output block
    acc = jnp.dot(w_ref[...], p_ref[0],
                  preferred_element_type=jnp.float32)        # MXU
    o_ref[0] = jnp.maximum(acc + b_ref[...], 0.0)            # VPU bias + ReLU


def _lane_tile(hw: int, n: int) -> int:
    """Lane-tile (last-dim block) for the (N, Kp, H*W) slab.

    Keep tiles lane-dense (multiple of 128) and as big as possible; split the
    H*W axis only to cap very large tiles or to expose >=2 parallel grid steps
    (megacore) when the batch dimension alone cannot provide them.
    """
    if hw % 128 != 0:
        return hw                         # odd spatial sizes: one full tile
    tl = min(hw, 4096)
    while hw % tl:                        # largest mult-of-128 divisor <= 4096
        tl -= 128
    if n == 1 and hw // tl < 2 and hw >= 256:
        tl = max(t for t in range(128, hw // 2 + 1, 128) if hw % t == 0)
    return tl


def _engine_conv(patches_t: jax.Array, w_t: jax.Array, b_col: jax.Array,
                 *, lane_tile: int) -> jax.Array:
    """patches_t: (N, Kp, HW) f32, w_t: (Cout, Kp) f32, b_col: (Cout, 1) f32."""
    N, Kp, HW = patches_t.shape
    Cout = w_t.shape[0]
    grid = (N, HW // lane_tile)
    return pl.pallas_call(
        _conv_kernel,
        out_shape=jax.ShapeDtypeStruct((N, Cout, HW), jnp.float32),
        grid_spec=pltpu.PrefetchScalarGridSpec(
            num_scalar_prefetch=0,
            grid=grid,
            in_specs=[
                pl.BlockSpec((1, Kp, lane_tile), lambda n, j: (n, 0, j)),
                pl.BlockSpec((Cout, Kp), lambda n, j: (0, 0)),   # resident
                pl.BlockSpec((Cout, 1), lambda n, j: (0, 0)),    # resident
            ],
            out_specs=pl.BlockSpec((1, Cout, lane_tile),
                                   lambda n, j: (n, 0, j)),
        ),
        compiler_params=pltpu.CompilerParams(
            dimension_semantics=("parallel", "parallel"),
            # Allow XLA to fuse the im2col producer into the kernel's input
            # instead of materializing the (N, Kp, HW) slab in HBM.
            allow_input_fusion=[True, False, False],
        ),
    )(patches_t, w_t, b_col)


# ----------------------------------------------------------------------------
# TRTWrapper-equivalent: dict of named inputs -> dict of named f32 outputs
# ----------------------------------------------------------------------------
class TRTWrapper:
    """Synthetic 'engine': Conv2d(Cin=4, Cout=8, k=3, pad=1) + bias + ReLU."""

    def __init__(self, output_names: Optional[Sequence[str]] = None) -> None:
        self._input_names = ["input"]
        self._output_names = list(output_names) if output_names else ["output"]

        # Engine "weights" — deterministic init in-script (no checkpoint load).
        self.cin, self.cout, self.kh, self.kw = 4, 8, 3, 3
        key = jax.random.PRNGKey(0)
        kw_key, kb_key = jax.random.split(key)
        # torch conv weight layout (Cout, Cin, KH, KW)
        self.weight = jax.random.normal(
            kw_key, (self.cout, self.cin, self.kh, self.kw),
            dtype=jnp.float32) * 0.1
        self.bias = jax.random.normal(kb_key, (self.cout,),
                                      dtype=jnp.float32) * 0.1

        # Optimization profile (min, opt, max) for the single dynamic input.
        self._profile = ((1, 4, 8, 8), (2, 4, 16, 16), (8, 4, 64, 64))

    def forward(self, inputs: Dict[str, jax.Array]) -> Dict[str, jax.Array]:
        assert self._input_names is not None
        assert self._output_names is not None

        x = None
        for input_name, input_tensor in inputs.items():
            assert input_name in self._input_names
            profile = self._profile
            assert input_tensor.ndim == len(profile[0]), \
                "Input dim is different from engine profile."
            for s_min, s_input, s_max in zip(profile[0], input_tensor.shape,
                                             profile[2]):
                assert s_min <= s_input <= s_max, (
                    f"Input shape should be between {profile[0]} and "
                    f"{profile[2]} but get {tuple(input_tensor.shape)}.")
            # TRT casts long -> int; engine itself computes in float32.
            if input_tensor.dtype == jnp.int64:
                input_tensor = input_tensor.astype(jnp.int32)
            x = input_tensor.astype(jnp.float32)

        # ---- "engine execution" ------------------------------------------
        N, C, H, W = x.shape
        assert C == self.cin
        HW = H * W
        K = self.kh * self.kw * self.cin
        Kp = _round_up(K, 8)                 # pad contraction dim to sublanes

        # Transposed im2col (glue): (N, Kp, H*W) with rows ordered (kh, kw, c).
        # Lane dim = H*W (dense); zero rows pad K up to Kp (no effect on dot).
        xp = jnp.pad(x, ((0, 0), (0, 0), (1, 1), (1, 1)))   # padded NCHW
        rows = []
        for kh in range(self.kh):
            for kw in range(self.kw):
                rows.append(
                    xp[:, :, kh:kh + H, kw:kw + W].reshape(N, self.cin, HW))
        if Kp > K:
            rows.append(jnp.zeros((N, Kp - K, HW), jnp.float32))
        patches_t = jnp.concatenate(rows, axis=1)            # (N, Kp, HW)

        # Weight (Cout,Cin,KH,KW) -> (Cout, KH,KW,Cin) -> (Cout, K) matching
        # the (kh, kw, c) row ordering of patches_t; zero-pad to Kp.
        w_t = jnp.transpose(self.weight, (0, 2, 3, 1)).reshape(self.cout, K)
        if Kp > K:
            w_t = jnp.pad(w_t, ((0, 0), (0, Kp - K)))
        b_col = self.bias.reshape(self.cout, 1)

        # Hot path in Pallas: fused transposed GEMM + bias + ReLU.
        tl = _lane_tile(HW, N)
        out_t = _engine_conv(patches_t, w_t, b_col, lane_tile=tl)  # (N,Cout,HW)

        # (N, Cout, H*W) -> NCHW is a metadata-only reshape (no transpose).
        out = out_t.reshape(N, self.cout, H, W)

        outputs = {}
        for output_name in self._output_names:
            outputs[output_name] = out
        return outputs

    __call__ = forward

    # TODO(synk): TRT engine deserialization, CUDA binding pointers and
    # execute_async_v2 stream semantics have no Pallas equivalent.


# ----------------------------------------------------------------------------
# Pure-JAX reference (correctness check)
# ----------------------------------------------------------------------------
def _ref_forward(x, weight, bias):
    y = jax.lax.conv_general_dilated(
        x.astype(jnp.float32), weight, window_strides=(1, 1), padding="SAME",
        dimension_numbers=("NCHW", "OIHW", "NCHW"))
    y = y + bias.reshape(1, -1, 1, 1)
    return jnp.maximum(y, 0.0)


if __name__ == "__main__":
    wrapper = TRTWrapper(output_names=["output"])

    key = jax.random.PRNGKey(0)
    x = jax.random.normal(key, (2, 4, 16, 16), dtype=jnp.float32)  # NCHW

    outputs = wrapper({"input": x})
    out = outputs["output"]
    jax.block_until_ready(out)

    ref = _ref_forward(x, wrapper.weight, wrapper.bias)
    assert out.shape == ref.shape == (2, 8, 16, 16)
    assert out.dtype == jnp.float32
    assert jnp.allclose(out, ref, rtol=1e-4, atol=1e-4)

    print("KERNEL_OK")
</pallas_src>

<mosaic_0001>
module attributes {stable_mosaic.version = 11 : i64} {
  func.func @_conv_kernel(%arg0: i32, %arg1: i32, %arg2: memref<1x40x256xf32, #tpu.memory_space<vmem>>, %arg3: memref<8x40xf32, #tpu.memory_space<vmem>>, %arg4: memref<8x1xf32, #tpu.memory_space<vmem>>, %arg5: memref<1x8x256xf32, #tpu.memory_space<vmem>>) attributes {dimension_semantics = [#tpu.dimension_semantics<parallel>, #tpu.dimension_semantics<parallel>], iteration_bounds = array<i64: 2, 1>, scalar_prefetch = 0 : i64, scratch_operands = 0 : i64, tpu.core_type = #tpu.core_type<tc>, window_params = [{transform_indices = @transform_0, window_bounds = array<i64: 1, 40, 256>}, {pipeline_mode = #tpu.pipeline_mode<synchronous>, transform_indices = @transform_1, window_bounds = array<i64: 8, 40>}, {pipeline_mode = #tpu.pipeline_mode<synchronous>, transform_indices = @transform_2, window_bounds = array<i64: 8, 1>}, {transform_indices = @transform_3, window_bounds = array<i64: 1, 8, 256>}]} {
    %c0 = arith.constant 0 : index
    %c0_0 = arith.constant 0 : index
    %0 = vector.load %arg3[%c0, %c0_0] : memref<8x40xf32, #tpu.memory_space<vmem>>, vector<8x40xf32>
    %c0_1 = arith.constant 0 : index
    %c0_2 = arith.constant 0 : index
    %c0_3 = arith.constant 0 : index
    %1 = vector.load %arg2[%c0_1, %c0_2, %c0_3] : memref<1x40x256xf32, #tpu.memory_space<vmem>>, vector<1x40x256xf32>
    %2 = vector.shape_cast %1 : vector<1x40x256xf32> to vector<40x256xf32>
    %cst = arith.constant dense<0.000000e+00> : vector<8x256xf32>
    %3 = tpu.matmul %0, %2, %cst {dimension_numbers = #tpu.dot_dimension_numbers<[1], [0], [0], [1], [0, 0, 1, 1], [], []>} : vector<8x40xf32>, vector<40x256xf32>, vector<8x256xf32> -> vector<8x256xf32>
    %c0_4 = arith.constant 0 : index
    %c0_5 = arith.constant 0 : index
    %4 = vector.load %arg4[%c0_4, %c0_5] : memref<8x1xf32, #tpu.memory_space<vmem>>, vector<8x1xf32>
    %5 = vector.broadcast %4 : vector<8x1xf32> to vector<8x256xf32>
    %6 = arith.addf %3, %5 : vector<8x256xf32>
    %cst_6 = arith.constant 0.000000e+00 : f32
    %7 = vector.broadcast %cst_6 : f32 to vector<8x256xf32>
    %8 = arith.maximumf %6, %7 : vector<8x256xf32>
    %c0_7 = arith.constant 0 : index
    %c0_8 = arith.constant 0 : index
    %c0_9 = arith.constant 0 : index
    %9 = vector.load %arg5[%c0_7, %c0_8, %c0_9] : memref<1x8x256xf32, #tpu.memory_space<vmem>>, vector<1x8x256xf32>
    %10 = vector.shape_cast %9 : vector<1x8x256xf32> to vector<8x256xf32>
    %11 = vector.shape_cast %8 : vector<8x256xf32> to vector<1x8x256xf32>
    tpu.vector_store %arg5[%c0_7, %c0_8, %c0_9], %11 {strides = array<i32>} : memref<1x8x256xf32, #tpu.memory_space<vmem>>, vector<1x8x256xf32>,
    return
  }
  func.func @transform_0(%arg0: i32, %arg1: i32) -> (i32, i32, i32) {
    %c0_i32 = arith.constant 0 : i32
    %c0_i32_0 = arith.constant 0 : i32
    return %arg0, %c0_i32, %arg1 : i32, i32, i32
  }
  func.func @transform_1(%arg0: i32, %arg1: i32) -> (i32, i32) {
    %c0_i32 = arith.constant 0 : i32
    %c0_i32_0 = arith.constant 0 : i32
    %c0_i32_1 = arith.constant 0 : i32
    return %c0_i32, %c0_i32_0 : i32, i32
  }
  func.func @transform_2(%arg0: i32, %arg1: i32) -> (i32, i32) {
    %c0_i32 = arith.constant 0 : i32
    %c0_i32_0 = arith.constant 0 : i32
    %c0_i32_1 = arith.constant 0 : i32
    return %c0_i32, %c0_i32_0 : i32, i32
  }
  func.func @transform_3(%arg0: i32, %arg1: i32) -> (i32, i32, i32) {
    %c0_i32 = arith.constant 0 : i32
    %c0_i32_0 = arith.constant 0 : i32
    return %arg0, %c0_i32, %arg1 : i32, i32, i32
  }
}

</mosaic_0001>

<llo_original>
// kernel: tpu_custom_call.1
$region0: #{tpu_custom_call.1}
  #allocation0 [shape = 'u32[]', space=smem, size = 0x4, offset = 0x4, fixed_abs, tag = 'smem constant byte address 0x4 - core index']
  #allocation1 [shape = 'u32[72,128]{1,0:T(1,128)}', space=vmem, size = 0x9000, scoped, tag = 'internal scratch']
  %s0 = inlined_call_operand.hbm [shape: f32[2,40,256], index: 0, kind: input, shape index: {}]
  %s1 = inlined_call_operand.vmem [shape: f32[8,40], index: 1, kind: input, shape index: {}]
  %s2 = inlined_call_operand.vmem [shape: f32[8,1], index: 2, kind: input, shape index: {}]
  %s3 = inlined_call_operand.hbm [shape: f32[2,8,256], index: 3, kind: output, shape index: {}]
  %s4 = sld [smem:[#allocation0]]
  $region49: #{tpu_custom_call.1} parent=0
    _
  %s6 = ssub.s32 1, %s4
  %s7 = scalar_select 0, %s6, %s4
  $region1: #{tpu_custom_call.1} parent=0
    #allocation2 [shape = 'u8[81920]{0}', space=vmem, size = 0x14000, scoped, tag = 'input window, operand 0']
    #allocation3 [shape = 's32[2]{0}', space=sflag, size = 0x8, scoped, tag = 'scoped memory for tpu_custom_call.1']
    #allocation4 [shape = 's32[2]{0}', space=sflag, size = 0x8, scoped, tag = 'scoped memory for tpu_custom_call.1']
    #allocation5 [shape = 'u8[16384]{0}', space=vmem, size = 0x4000, scoped, tag = 'output window, operand 0']
    %8 = vsyncpa [#allocation3], 0
    %s9 = scalar_lea.sflag [#allocation3], 1
    %10 = vsyncpa %s9, 0
    %11 = vsyncpa [#allocation4], 0
    %s12 = scalar_lea.sflag [#allocation4], 1
    %13 = vsyncpa %s12, 0
    loop: start=0, step=1, limit=4
    $region2: #{tpu_custom_call.1} parent=1 // loop_pre_header
      _
    $region3: #{tpu_custom_call.1} parent=1 // loop_header
      %s15 = sphi 0, %s19
      %p16 = scmp.ge.s32.totalorder %s15, 4
      %s22 = sphi 0, %s34
      %s23 = sphi 0, %s30
      %s24 = sphi 0, %s22
      %s25 = sphi 0, %s23
      %s26 = sphi 0, %s24
      %s27 = sphi 0, %s25
      %s39 = sphi 0, %s41
      %s42 = sphi 0, %s39
      %s43 = sphi 0, %s42
      %s59 = sphi 0, %s43
      %s63 = sphi 0, %s63
      %s65 = sphi 0, %s63
      %s66 = sphi 0, %s65
      %s80 = sphi 0, %s66
      %s84 = sphi 0, %s84
      %s86 = sphi 0, %s84
      %s87 = sphi 0, %s86
      %s101 = sphi 0, %s87
      %s109 = sphi 0, %s111
      %s112 = sphi 0, %s109
      %s113 = sphi 0, %s112
      %s129 = sphi 0, %s113
    $region4: #{tpu_custom_call.1} parent=1 // loop_header_branch
      %18 = sbr.rel (%p16) target = $region8
    $region5: #{tpu_custom_call.1} parent=1 // loop_body
      %s20 = ssub.s32 %s15, 1
      %s21 = ssub.s32 %s15, 2
      %s28 = sadd.s32 1, %s23
      %p29 = scmp.ge.s32.totalorder %s28, 1
      %s30 = scalar_select %p29, 0, %s28
      %s31 = sadd.s32 1, %s22
      %s32 = scalar_select %p29, %s31, %s22
      %p33 = scmp.ge.s32.totalorder %s32, 2
      %s34 = scalar_select %p33, 0, %s32
      %s35 = ssub.s32 %s22, %s34
      %s36 = ssub.s32 %s23, %s30
      %s37 = sor.u32 %s35, %s36
      %p38 = scmp.eq.s32.totalorder %s37, 0
      %s40 = sadd.s32 %s39, 1
      %s41 = scalar_select %p38, %s39, %s40
      %p44 = pneg %p38
      %p45 = scmp.eq.s32.totalorder %s15, 1
      %p46 = por %p44, %p45
      %p47 = scmp.ne.s32.totalorder %s39, %s42
      %p48 = scmp.eq.s32.totalorder %s15, 0
      %p49 = por %p47, %p48
      %p50 = scmp.ne.s32.totalorder %s39, %s42
      %p51 = scmp.eq.s32.totalorder %s20, 1
      %p52 = por %p50, %p51
      %p53 = scmp.ne.s32.totalorder %s42, %s43
      %p54 = scmp.eq.s32.totalorder %s20, 0
      %p55 = por %p53, %p54
      %p56 = scmp.ne.s32.totalorder %s42, %s43
      %p57 = scmp.eq.s32.totalorder %s21, 1
      %p58 = por %p56, %p57
      %p60 = scmp.ne.s32.totalorder %s43, %s59
      %p61 = scmp.eq.s32.totalorder %s21, 0
      %p62 = por %p60, %p61
      %s64 = sadd.s32 %s63, 1
      %p67 = scmp.eq.s32.totalorder %s15, 1
      %p68 = scmp.ne.s32.totalorder %s63, %s65
      %p69 = scmp.eq.s32.totalorder %s15, 0
      %p70 = por %p68, %p69
      %p71 = scmp.ne.s32.totalorder %s63, %s65
      %p72 = scmp.eq.s32.totalorder %s20, 1
      %p73 = por %p71, %p72
      %p74 = scmp.ne.s32.totalorder %s65, %s66
      %p75 = scmp.eq.s32.totalorder %s20, 0
      %p76 = por %p74, %p75
      %p77 = scmp.ne.s32.totalorder %s65, %s66
      %p78 = scmp.eq.s32.totalorder %s21, 1
      %p79 = por %p77, %p78
      %p81 = scmp.ne.s32.totalorder %s66, %s80
      %p82 = scmp.eq.s32.totalorder %s21, 0
      %p83 = por %p81, %p82
      %s85 = sadd.s32 %s84, 1
      %p88 = scmp.eq.s32.totalorder %s15, 1
      %p89 = scmp.ne.s32.totalorder %s84, %s86
      %p90 = scmp.eq.s32.totalorder %s15, 0
      %p91 = por %p89, %p90
      %p92 = scmp.ne.s32.totalorder %s84, %s86
      %p93 = scmp.eq.s32.totalorder %s20, 1
      %p94 = por %p92, %p93
      %p95 = scmp.ne.s32.totalorder %s86, %s87
      %p96 = scmp.eq.s32.totalorder %s20, 0
      %p97 = por %p95, %p96
      %p98 = scmp.ne.s32.totalorder %s86, %s87
      %p99 = scmp.eq.s32.totalorder %s21, 1
      %p100 = por %p98, %p99
      %p102 = scmp.ne.s32.totalorder %s87, %s101
      %p103 = scmp.eq.s32.totalorder %s21, 0
      %p104 = por %p102, %p103
      %s105 = ssub.s32 %s22, %s34
      %s106 = ssub.s32 %s23, %s30
      %s107 = sor.u32 %s105, %s106
      %p108 = scmp.eq.s32.totalorder %s107, 0
      %s110 = sadd.s32 %s109, 1
      %s111 = scalar_select %p108, %s109, %s110
      %p114 = pneg %p108
      %p115 = scmp.eq.s32.totalorder %s15, 1
      %p116 = por %p114, %p115
      %p117 = scmp.ne.s32.totalorder %s109, %s112
      %p118 = scmp.eq.s32.totalorder %s15, 0
      %p119 = por %p117, %p118
      %p120 = scmp.ne.s32.totalorder %s109, %s112
      %p121 = scmp.eq.s32.totalorder %s20, 1
      %p122 = por %p120, %p121
      %p123 = scmp.ne.s32.totalorder %s112, %s113
      %p124 = scmp.eq.s32.totalorder %s20, 0
      %p125 = por %p123, %p124
      %p126 = scmp.ne.s32.totalorder %s112, %s113
      %p127 = scmp.eq.s32.totalorder %s21, 1
      %p128 = por %p126, %p127
      %p130 = scmp.ne.s32.totalorder %s113, %s129
      %p131 = scmp.eq.s32.totalorder %s21, 0
      %p132 = por %p130, %p131
      %p133 = scmp.le.s32.totalorder 1, %s15
      %p134 = scmp.lt.s32.totalorder %s15, 3
      %p135 = pnand %p133, %p134
      %p136 = pneg %p135
      // Predicated region
      $region9: #{tpu_custom_call.1} parent=5 // pred_check
        _
      $region10: #{tpu_custom_call.1} parent=5 // pred_check_branch
        %138 = sbr.rel (%p135) target = $region12
      $region11: #{tpu_custom_call.1} parent=5 // pred_region
        %s139 = ssub.s32 %s15, 1
        // Predicated region
        $region13: #{tpu_custom_call.1} parent=11 // pred_check
          %p140 = pneg %p76
        $region14: #{tpu_custom_call.1} parent=11 // pred_check_branch
          %142 = sbr.rel (%p140) target = $region16
        $region15: #{tpu_custom_call.1} parent=11 // pred_region
          _
        $region16: #{tpu_custom_call.1} parent=11 // pred_fallthru
          _
        // Predicated region
        $region17: #{tpu_custom_call.1} parent=11 // pred_check
          %p143 = pneg %p97
        $region18: #{tpu_custom_call.1} parent=11 // pred_check_branch
          %145 = sbr.rel (%p143) target = $region20
        $region19: #{tpu_custom_call.1} parent=11 // pred_region
          _
        $region20: #{tpu_custom_call.1} parent=11 // pred_fallthru
          _
      $region12: #{tpu_custom_call.1} parent=5 // pred_fallthru
        _
      %p146 = scmp.lt.s32.totalorder %s15, 2
      // Predicated region
      $region21: #{tpu_custom_call.1} parent=5 // pred_check
        %p147 = pneg %p146
      $region22: #{tpu_custom_call.1} parent=5 // pred_check_branch
        %149 = sbr.rel (%p147) target = $region24
      $region23: #{tpu_custom_call.1} parent=5 // pred_region
        // Predicated region
        $region25: #{tpu_custom_call.1} parent=23 // pred_check
          %p150 = pneg %p49
        $region26: #{tpu_custom_call.1} parent=23 // pred_check_branch
          %152 = sbr.rel (%p150) target = $region28
        $region27: #{tpu_custom_call.1} parent=23 // pred_region
          %s153 = sand.u32 %s39, 1
          %s154 = scalar_lea.sflag [#allocation3], %s153
          %s155 = sand.u32 %s39, 1
          %s156 = smul.addr %s155, 80
          %s157 = scalar_lea.vmem [#allocation2], %s156
          %s158 = smul.u32 2, %s23
          %160 = vsyncadd %s154, 0
          %s161 = smul.addr %s22, 10
          %s162 = sadd.s32 %s158, %s161
          %s163 = smul.addr %s162, 8
          %s164 = scalar_lea.hbm %s0, %s163
          %s165 = sshll.u32 %s164, 4
          %s166 = int_to_ptr.hbm [resolvable:$true] %s165
          %s167 = sshll.u32 %s157, 4
          %s168 = int_to_ptr.vmem [resolvable:$true] %s167
          %173 = dma.hbm_to_vmem [thread:$0]  %s166, 1280, %s168, %s154, 256, 256, 16
        $region28: #{tpu_custom_call.1} parent=23 // pred_fallthru
          _
      $region24: #{tpu_custom_call.1} parent=5 // pred_fallthru
        _
      %p174 = scmp.le.s32.totalorder 1, %s15
      %p175 = scmp.lt.s32.totalorder %s15, 3
      %p176 = pnand %p174, %p175
      %p177 = pneg %p176
      // Predicated region
      $region29: #{tpu_custom_call.1} parent=5 // pred_check
        _
      $region30: #{tpu_custom_call.1} parent=5 // pred_check_branch
        %179 = sbr.rel (%p176) target = $region32
      $region31: #{tpu_custom_call.1} parent=5 // pred_region
        %s180 = ssub.s32 %s15, 1
        %s181 = sand.u32 %s42, 1
        %s182 = scalar_lea.sflag [#allocation3], %s181
        %s183 = sand.u32 %s42, 1
        %s184 = smul.addr %s183, 80
        %s185 = scalar_lea.vmem [#allocation2], %s184
        // Predicated region
        $region33: #{tpu_custom_call.1} parent=31 // pred_check
          %p186 = pneg %p55
        $region34: #{tpu_custom_call.1} parent=31 // pred_check_branch
          %188 = sbr.rel (%p186) target = $region36
        $region35: #{tpu_custom_call.1} parent=31 // pred_region
          %190 = dma.done %s182, 1280
        $region36: #{tpu_custom_call.1} parent=31 // pred_fallthru
          _
        %s191 = sand.u32 %s42, 1
        %s192 = scalar_lea.sflag [#allocation3], %s191
        %s193 = sand.u32 %s42, 1
        %s194 = smul.addr %s193, 80
        %s195 = scalar_lea.vmem [#allocation2], %s194
        %p196 = pneg %p55
        %p197 = pneg %p52
        %p198 = pneg %p76
        %p199 = pneg %p73
        %p200 = pneg %p97
        %p201 = pneg %p94
        %p202 = pneg %p125
        %p203 = pneg %p122
        %s204 = sand.u32 %s112, 1
        %s205 = scalar_lea.sflag [#allocation4], %s204
        %s206 = sand.u32 %s112, 1
        %s207 = smul.addr %s206, 16
        %s208 = scalar_lea.vmem [#allocation5], %s207
        %s209 = smul.u32 2, %s25
        %s210 = smul.u32 2, %s25
        %v211 = vld [vmem:[%s1] sm:$0xff]
        %v212 = vld [vmem:[%s185] sm:$0xff]
        %v213 = vld [vmem:[%s185 + $0x8] sm:$0xff]
        %v214 = vld [vmem:[%s185 + $0x10] sm:$0xff]
        %v215 = vld [vmem:[%s185 + $0x18] sm:$0xff]
        %v216 = vld [vmem:[%s185 + $0x20] sm:$0xff]
        %v217 = vld [vmem:[%s185 + $0x28] sm:$0xff]
        %v218 = vld [vmem:[%s185 + $0x30] sm:$0xff]
        %v219 = vld [vmem:[%s185 + $0x38] sm:$0xff]
        %v220 = vld [vmem:[%s185 + $0x40] sm:$0xff]
        %v221 = vld [vmem:[%s185 + $0x48] sm:$0xff]
        %v222 = vld [vmem:[%s2] sm:$0xff]
        %224 = vset.pattern.permute.xlu0 0
        %225 = vperm.xlu0 %224, %v222
        %v226 = vpop.permute.xlu0 %225
        %vm228 = vcmask 326656
        %v230 = vsel %vm228, %v211, 0
        %232 = vmatpush.msra.mxu0 0.0
        %233 = vmatpush.msra.mxu0 0.0
        %234 = vmatpush.msra.mxu0 0.0
        %235 = vmatpush.msra.mxu0 0.0
        %236 = vmatpush.msra.mxu0 0.0
        %237 = vmatpush.msra.mxu0 0.0
        %238 = vmatpush.msra.mxu0 0.0
        %239 = vmatpush.msra.mxu0 0.0
        %240 = vmatpush.msra.mxu0 0.0
        %241 = vmatpush.msra.mxu0 0.0
        %242 = vmatpush.msra.mxu0 0.0
        %243 = vmatpush.msra.mxu0 %v220
        %244 = vmatpush.msra.mxu0 %v218
        %245 = vmatpush.msra.mxu0 %v216
        %246 = vmatpush.msra.mxu0 %v214
        %247 = vmatpush.msra.mxu0 %v212
        %248 = vmatmul.f32.gmra.mxu0 %v230
        %v249 = vpop.f32.mrf.mxu0
        %v250 = vadd.f32 %v226, %v249
        %251 = vdwg.mxu0
        %252 = vmatpush.msra.mxu0 0.0
        %253 = vmatpush.msra.mxu0 0.0
        %254 = vmatpush.msra.mxu0 0.0
        %255 = vmatpush.msra.mxu0 0.0
        %256 = vmatpush.msra.mxu0 0.0
        %257 = vmatpush.msra.mxu0 0.0
        %258 = vmatpush.msra.mxu0 0.0
        %259 = vmatpush.msra.mxu0 0.0
        %260 = vmatpush.msra.mxu0 0.0
        %261 = vmatpush.msra.mxu0 0.0
        %262 = vmatpush.msra.mxu0 0.0
        %263 = vmatpush.msra.mxu0 %v221
        %264 = vmatpush.msra.mxu0 %v219
        %265 = vmatpush.msra.mxu0 %v217
        %266 = vmatpush.msra.mxu0 %v215
        %267 = vmatpush.msra.mxu0 %v213
        %268 = vmatmul.f32.gmra.mxu0 %v230
        %v269 = vpop.f32.mrf.mxu0
        %v270 = vadd.f32 %v226, %v269
        %271 = vdwg.mxu0
        %v272 = vmax.f32 %v250, 0.0
        %v273 = vmax.f32 %v270, 0.0
        %274 = vst [vmem:[%s208] sm:$0xff] %v272
        %275 = vst [vmem:[%s208 + $0x8] sm:$0xff] %v273
        %s276 = sand.u32 %s112, 1
        %s277 = scalar_lea.sflag [#allocation4], %s276
        %s278 = sand.u32 %s112, 1
        %s279 = smul.addr %s278, 16
        %s280 = scalar_lea.vmem [#allocation5], %s279
        // Predicated region
        $region37: #{tpu_custom_call.1} parent=31 // pred_check
          %p281 = pneg %p122
        $region38: #{tpu_custom_call.1} parent=31 // pred_check_branch
          %283 = sbr.rel (%p281) target = $region40
        $region39: #{tpu_custom_call.1} parent=31 // pred_region
          %s284 = smul.u32 2, %s25
          %286 = vsyncadd %s277, 0
          %s287 = smul.addr %s24, 2
          %s288 = sadd.s32 %s284, %s287
          %s289 = smul.addr %s288, 8
          %s290 = scalar_lea.hbm %s3, %s289
          %s292 = sshll.u32 %s280, 4
          %s293 = int_to_ptr.vmem [resolvable:$true] %s292
          %s294 = sshll.u32 %s290, 4
          %s295 = int_to_ptr.hbm [resolvable:$true] %s294
          %297 = dma.vmem_to_hbm [thread:$0]  %s293, 256, %s295, %s277
        $region40: #{tpu_custom_call.1} parent=31 // pred_fallthru
          _
      $region32: #{tpu_custom_call.1} parent=5 // pred_fallthru
        _
      %p298 = scmp.le.s32.totalorder 2, %s15
      // Predicated region
      $region41: #{tpu_custom_call.1} parent=5 // pred_check
        %p299 = pneg %p298
      $region42: #{tpu_custom_call.1} parent=5 // pred_check_branch
        %301 = sbr.rel (%p299) target = $region44
      $region43: #{tpu_custom_call.1} parent=5 // pred_region
        %s302 = ssub.s32 %s15, 2
        // Predicated region
        $region45: #{tpu_custom_call.1} parent=43 // pred_check
          %p303 = pneg %p128
        $region46: #{tpu_custom_call.1} parent=43 // pred_check_branch
          %305 = sbr.rel (%p303) target = $region48
        $region47: #{tpu_custom_call.1} parent=43 // pred_region
          %s306 = sand.u32 %s113, 1
          %s307 = scalar_lea.sflag [#allocation4], %s306
          %s308 = sand.u32 %s113, 1
          %s309 = smul.addr %s308, 16
          %s310 = scalar_lea.vmem [#allocation5], %s309
          %312 = dma.done %s307, 256
        $region48: #{tpu_custom_call.1} parent=43 // pred_fallthru
          _
      $region44: #{tpu_custom_call.1} parent=5 // pred_fallthru
        _
    $region6: #{tpu_custom_call.1} parent=1 // loop_footer
      %s19 = sadd.s32 1, %s15
    $region7: #{tpu_custom_call.1} parent=1 // loop_footer_branch
      %14 = sbr.rel target = $region3
    $region8: #{tpu_custom_call.1} parent=1 // loop_exit
      _
    %313 = vsyncpa [#allocation3], 1
    %s314 = scalar_lea.sflag [#allocation3], 1
    %315 = vsyncpa %s314, 1
    %316 = vsyncpa [#allocation4], 1
    %s317 = scalar_lea.sflag [#allocation4], 1
    %318 = vsyncpa %s317, 1

</llo_original>
